<compile_context>
chip_gen: v7x
topology: tpu7x:2x2x1
jax: 0.10.0
libtpu: 0.0.40
codegen_flags: <defaults>
</compile_context>

<pallas_src>
import numpy as np
import jax
import jax.numpy as jnp
from jax import lax
from jax.experimental import pallas as pl
from jax.experimental.pallas import tpu as pltpu

F32 = jnp.float32
BF16 = jnp.bfloat16
I8 = jnp.int8

# Safe on every listed generation (v5e/v6e: 128 MiB physical, v7x: 64 MiB).
# With the k-blocked streaming the actual per-call VMEM use is only a few MiB,
# so this limit is headroom, not a tuning knob.
_VMEM_LIMIT = 48 * 1024 * 1024


def _adj_to_bf16(adj_i8):
    # i8 -> f32 -> bf16: both steps are guaranteed Mosaic lowerings; the conv
    # passes are HBM-bound so the extra VPU unpack/cast is free filler.
    return adj_i8.astype(F32).astype(BF16)


# ----------------------------------------------------------------------------
# Fused small-graph kernel (everything resident, single grid step)
# ----------------------------------------------------------------------------

def _fused_kernel(x_ref, adj_ref, we_ref, be_ref, w1_ref, b1_ref,
                  w2_ref, b2_ref, w3_ref, b3_ref, w4t_ref, b4_ref, out_ref):
    adj = _adj_to_bf16(adj_ref[...])
    # Node encoder (kept f32 x f32: tiny, keeps input features exact).
    h = jnp.dot(x_ref[...], we_ref[...], preferred_element_type=F32)
    h = jnp.maximum(h + be_ref[...], 0.0)
    # Conv layer 1: bf16 aggregation on the MXU, f32 accumulate + residual.
    agg = jnp.dot(adj, h.astype(BF16), preferred_element_type=F32)
    h = jnp.dot((agg + h).astype(BF16), w1_ref[...],
                preferred_element_type=F32) + b1_ref[...]
    h = jnp.maximum(h, 0.0)
    # Conv layer 2.
    agg = jnp.dot(adj, h.astype(BF16), preferred_element_type=F32)
    h = jnp.dot((agg + h).astype(BF16), w2_ref[...],
                preferred_element_type=F32) + b2_ref[...]
    h = jnp.maximum(h, 0.0)
    # Output MLP head.
    z = jnp.dot(h.astype(BF16), w3_ref[...],
                preferred_element_type=F32) + b3_ref[...]
    z = jnp.maximum(z, 0.0)
    # (8, H2) @ (N, H2)^T -> (8, N): node index lands on lanes so the output
    # store is lane-dense. All rows of w4t are identical; take row 0.
    logits = lax.dot_general(w4t_ref[...], z,
                             dimension_numbers=(((1,), (1,)), ((), ())),
                             preferred_element_type=F32)
    out_ref[...] = jax.nn.sigmoid(logits[0:1, :] + b4_ref[...])


# ----------------------------------------------------------------------------
# Tiled large-graph kernels (row tiles x adjacency column blocks)
# ----------------------------------------------------------------------------

def _encoder_kernel(x_ref, we_ref, be_ref, h_ref, h_bf_ref):
    """h = relu(x @ We + be) for one row tile; emits f32 + bf16 copies."""
    h = jnp.dot(x_ref[...], we_ref[...], preferred_element_type=F32)
    h = jnp.maximum(h + be_ref[...], 0.0)
    h_ref[...] = h
    h_bf_ref[...] = h.astype(BF16)


def _conv_kernel(adj_ref, hk_ref, hres_ref, w_ref, b_ref,
                 out_ref, out_bf_ref, acc_ref):
    """One graph-conv layer, k-blocked over adjacency columns:
       acc += A[i, k-block] @ h[k-block]; at last k: relu((acc + h[i]) @ W + b)."""
    k = pl.program_id(1)

    @pl.when(k == 0)
    def _init():
        acc_ref[...] = jnp.zeros_like(acc_ref)

    acc_ref[...] += jnp.dot(_adj_to_bf16(adj_ref[...]), hk_ref[...],
                            preferred_element_type=F32)

    @pl.when(k == pl.num_programs(1) - 1)
    def _finalize():
        h = acc_ref[...] + hres_ref[...]                       # residual in f32
        h = jnp.dot(h.astype(BF16), w_ref[...],
                    preferred_element_type=F32) + b_ref[...]
        h = jnp.maximum(h, 0.0)
        out_ref[...] = h
        out_bf_ref[...] = h.astype(BF16)


def _conv_head_kernel(adj_ref, hk_ref, hres_ref, w2_ref, b2_ref,
                      w3_ref, b3_ref, w4t_ref, b4_ref, out_ref, acc_ref):
    """Second conv layer + output MLP + sigmoid; lane-dense (1, TM) output."""
    k = pl.program_id(1)

    @pl.when(k == 0)
    def _init():
        acc_ref[...] = jnp.zeros_like(acc_ref)

    acc_ref[...] += jnp.dot(_adj_to_bf16(adj_ref[...]), hk_ref[...],
                            preferred_element_type=F32)

    @pl.when(k == pl.num_programs(1) - 1)
    def _finalize():
        h = acc_ref[...] + hres_ref[...]
        h = jnp.dot(h.astype(BF16), w2_ref[...],
                    preferred_element_type=F32) + b2_ref[...]
        h = jnp.maximum(h, 0.0)
        z = jnp.dot(h.astype(BF16), w3_ref[...],
                    preferred_element_type=F32) + b3_ref[...]
        z = jnp.maximum(z, 0.0)
        logits = lax.dot_general(w4t_ref[...], z,
                                 dimension_numbers=(((1,), (1,)), ((), ())),
                                 preferred_element_type=F32)
        out_ref[...] = jax.nn.sigmoid(logits[0:1, :] + b4_ref[...])


# ----------------------------------------------------------------------------
# Wrappers
# ----------------------------------------------------------------------------

def _prep_weights(params):
    return dict(
        we=params["we"].astype(F32), be=params["be"].astype(F32),
        w1=params["w1"].astype(BF16), b1=params["b1"].astype(F32),
        w2=params["w2"].astype(BF16), b2=params["b2"].astype(F32),
        w3=params["w3"].astype(BF16), b3=params["b3"].astype(F32),
        # (8, H2): replicate the single output column so the final projection
        # can be done transposed (lane-dense logits). Assumes output_dim == 1.
        w4t=jnp.tile(params["w4"].T, (8, 1)).astype(F32),
        b4=params["b4"].astype(F32),
    )


def _forward_fused(node_features, adj, params):
    N, D = node_features.shape
    n_pad = max(pl.cdiv(N, 128) * 128, 128)

    x_p = jnp.pad(node_features.astype(F32), ((0, n_pad - N), (0, 0)))
    # NOTE: exact only for integer edge counts <= 127 (int8).
    adj_i8 = jnp.pad(adj, ((0, n_pad - N), (0, n_pad - N))).astype(I8)

    w = _prep_weights(params)
    args = (x_p, adj_i8, w["we"], w["be"], w["w1"], w["b1"], w["w2"], w["b2"],
            w["w3"], w["b3"], w["w4t"], w["b4"])

    probs_row = pl.pallas_call(
        _fused_kernel,
        out_shape=jax.ShapeDtypeStruct((1, n_pad), F32),
        grid=(1,),
        in_specs=[pl.BlockSpec(a.shape, lambda i: (0, 0)) for a in args],
        out_specs=pl.BlockSpec((1, n_pad), lambda i: (0, 0)),
        compiler_params=pltpu.CompilerParams(
            dimension_semantics=("arbitrary",),
            vmem_limit_bytes=_VMEM_LIMIT),
    )(*args)
    return probs_row[0, :N]


def _forward_tiled(node_features, adj, params, *, tile_m, tile_k):
    N, D = node_features.shape
    H = params["we"].shape[1]

    assert tile_m % 128 == 0 and tile_k % 128 == 0
    tile_k = max(tile_k, tile_m)
    tile_k = (tile_k // tile_m) * tile_m          # ensure tile_m | tile_k
    n_pad = pl.cdiv(N, tile_k) * tile_k
    nt = n_pad // tile_m
    nk = n_pad // tile_k

    x_p = jnp.pad(node_features.astype(F32), ((0, n_pad - N), (0, 0)))
    # NOTE: exact only for integer edge counts <= 127 (int8).
    adj_i8 = jnp.pad(adj, ((0, n_pad - N), (0, n_pad - N))).astype(I8)
    w = _prep_weights(params)

    cp1 = pltpu.CompilerParams(dimension_semantics=("parallel",),
                               vmem_limit_bytes=_VMEM_LIMIT)
    cp2 = pltpu.CompilerParams(dimension_semantics=("parallel", "arbitrary"),
                               vmem_limit_bytes=_VMEM_LIMIT)

    row_h1 = pl.BlockSpec((tile_m, H), lambda i: (i, 0))

    # ---- call 1: node encoder (row-parallel; emits f32 + bf16 h) ------------
    h1_f32, h1_bf = pl.pallas_call(
        _encoder_kernel,
        out_shape=(jax.ShapeDtypeStruct((n_pad, H), F32),
                   jax.ShapeDtypeStruct((n_pad, H), BF16)),
        grid=(nt,),
        in_specs=[pl.BlockSpec((tile_m, D), lambda i: (i, 0)),
                  pl.BlockSpec(w["we"].shape, lambda i: (0, 0)),
                  pl.BlockSpec(w["be"].shape, lambda i: (0, 0))],
        out_specs=[row_h1, row_h1],
        compiler_params=cp1,
    )(x_p, w["we"], w["be"])

    # Shared conv specs: streamed int8 adjacency tile (pipelined over i and k),
    # bf16 h column block (k), f32 residual row tile (i, constant over k).
    conv_in = [
        pl.BlockSpec((tile_m, tile_k), lambda i, k: (i, k)),
        pl.BlockSpec((tile_k, H), lambda i, k: (k, 0)),
        pl.BlockSpec((tile_m, H), lambda i, k: (i, 0)),
    ]
    full2 = lambda a: pl.BlockSpec(a.shape, lambda i, k: (0, 0))
    row_h2 = pl.BlockSpec((tile_m, H), lambda i, k: (i, 0))

    # ---- call 2: graph conv layer 1 -----------------------------------------
    h2_f32, h2_bf = pl.pallas_call(
        _conv_kernel,
        out_shape=(jax.ShapeDtypeStruct((n_pad, H), F32),
                   jax.ShapeDtypeStruct((n_pad, H), BF16)),
        grid=(nt, nk),
        in_specs=conv_in + [full2(w["w1"]), full2(w["b1"])],
        out_specs=[row_h2, row_h2],
        scratch_shapes=[pltpu.VMEM((tile_m, H), F32)],
        compiler_params=cp2,
    )(adj_i8, h1_bf, h1_f32, w["w1"], w["b1"])

    # ---- call 3: graph conv layer 2 + output head (lane-dense output) -------
    probs_row = pl.pallas_call(
        _conv_head_kernel,
        out_shape=jax.ShapeDtypeStruct((1, n_pad), F32),
        grid=(nt, nk),
        in_specs=conv_in + [full2(w["w2"]), full2(w["b2"]),
                            full2(w["w3"]), full2(w["b3"]),
                            full2(w["w4t"]), full2(w["b4"])],
        out_specs=pl.BlockSpec((1, tile_m), lambda i, k: (0, i)),
        scratch_shapes=[pltpu.VMEM((tile_m, H), F32)],
        compiler_params=cp2,
    )(adj_i8, h2_bf, h2_f32, w["w2"], w["b2"], w["w3"], w["b3"],
      w["w4t"], w["b4"])

    return probs_row[0, :N]


def gcn_forward_pallas(node_features, adj, params, *,
                       fused_max_nodes=1024, tile_m=256, tile_k=1024):
    """Per-node sigmoid probabilities, shape [N]."""
    assert params["w4"].shape[1] == 1, "lane-dense head assumes output_dim == 1"
    N = node_features.shape[0]
    if N <= fused_max_nodes:
        return _forward_fused(node_features, adj, params)
    return _forward_tiled(node_features, adj, params, tile_m=tile_m, tile_k=tile_k)


# ----------------------------------------------------------------------------
# Pure-JAX reference (mirrors the PyTorch forward over all nodes, f32)
# ----------------------------------------------------------------------------

def gcn_forward_ref(node_features, adj, params):
    h = jax.nn.relu(node_features @ params["we"] + params["be"])
    h = jax.nn.relu((adj @ h + h) @ params["w1"] + params["b1"])
    h = jax.nn.relu((adj @ h + h) @ params["w2"] + params["b2"])
    z = jax.nn.relu(h @ params["w3"] + params["b3"])
    logits = z @ params["w4"] + params["b4"]
    return jax.nn.sigmoid(logits)[:, 0]


def make_params(key, node_dim, hidden_dim, output_dim=1):
    ks = jax.random.split(key, 10)
    h2 = hidden_dim // 2

    def lin(kw, fan_in, fan_out):
        bound = 1.0 / np.sqrt(fan_in)
        return jax.random.uniform(kw, (fan_in, fan_out), jnp.float32, -bound, bound)

    return {
        "we": lin(ks[0], node_dim, hidden_dim),
        "be": jax.random.uniform(ks[1], (1, hidden_dim), jnp.float32, -0.1, 0.1),
        "w1": lin(ks[2], hidden_dim, hidden_dim),
        "b1": jax.random.uniform(ks[3], (1, hidden_dim), jnp.float32, -0.1, 0.1),
        "w2": lin(ks[4], hidden_dim, hidden_dim),
        "b2": jax.random.uniform(ks[5], (1, hidden_dim), jnp.float32, -0.1, 0.1),
        "w3": lin(ks[6], hidden_dim, h2),
        "b3": jax.random.uniform(ks[7], (1, h2), jnp.float32, -0.1, 0.1),
        "w4": lin(ks[8], h2, output_dim),
        "b4": jax.random.uniform(ks[9], (1, output_dim), jnp.float32, -0.1, 0.1),
    }


def _make_graph(k_feat, N, node_dim, E):
    node_features = jax.random.normal(k_feat, (N, node_dim), jnp.float32)
    # Deterministic edge_index [2, E]; dense adjacency of the scatter-add loop.
    src = np.arange(E) % N
    dst = (np.arange(E) * 7 + 3) % N
    edge_index = np.stack([src, dst]).astype(np.int32)
    adj = jnp.zeros((N, N), jnp.float32).at[edge_index[1], edge_index[0]].add(1.0)
    return node_features, edge_index, adj


if __name__ == "__main__":
    # Small shapes consistent with the module.
    N = 16          # number of graph nodes
    node_dim = 8    # input feature dim
    hidden_dim = 32
    E = 24          # number of edges

    key = jax.random.PRNGKey(0)
    k_feat, k_edge, k_par = jax.random.split(key, 3)
    params = make_params(k_par, node_dim, hidden_dim)

    node_features, edge_index, adj = _make_graph(k_feat, N, node_dim, E)

    # post_mask: mark every other node as a "post".
    post_mask = np.zeros(N, dtype=bool)
    post_mask[::2] = True

    # --- test 1: small graph -> fused single-call path -----------------------
    probs_all = gcn_forward_pallas(node_features, adj, params)
    probs_all = jax.block_until_ready(probs_all)

    # Boolean-mask gather (dynamic shape) applied outside the kernel.
    probs_posts = np.asarray(probs_all)[post_mask]

    ref_all = np.asarray(gcn_forward_ref(node_features, adj, params))
    # Tolerance is the stated precision contract: bf16 aggregation + bf16
    # dense-layer matmuls inside the kernel (f32 accumulation throughout).
    np.testing.assert_allclose(np.asarray(probs_all), ref_all, rtol=2e-2, atol=2e-2)
    assert probs_posts.shape == (int(post_mask.sum()),)
    assert np.all((probs_posts >= 0.0) & (probs_posts <= 1.0))

    # --- test 2: force the tiled, k-blocked path on a slightly larger graph --
    N2, E2 = 200, 600
    feat2, _, adj2 = _make_graph(jax.random.fold_in(k_feat, 1), N2, node_dim, E2)
    probs2 = gcn_forward_pallas(feat2, adj2, params,
                                fused_max_nodes=0, tile_m=128, tile_k=128)
    probs2 = jax.block_until_ready(probs2)
    ref2 = np.asarray(gcn_forward_ref(feat2, adj2, params))
    np.testing.assert_allclose(np.asarray(probs2), ref2, rtol=2e-2, atol=2e-2)

    print("KERNEL_OK")
</pallas_src>

<mosaic_0001>
module attributes {stable_mosaic.version = 11 : i64} {
  func.func @_fused_kernel(%arg0: i32, %arg1: memref<128x8xf32, #tpu.memory_space<vmem>>, %arg2: memref<128x128xi8, #tpu.memory_space<vmem>>, %arg3: memref<8x32xf32, #tpu.memory_space<vmem>>, %arg4: memref<1x32xf32, #tpu.memory_space<vmem>>, %arg5: memref<32x32xbf16, #tpu.memory_space<vmem>>, %arg6: memref<1x32xf32, #tpu.memory_space<vmem>>, %arg7: memref<32x32xbf16, #tpu.memory_space<vmem>>, %arg8: memref<1x32xf32, #tpu.memory_space<vmem>>, %arg9: memref<32x16xbf16, #tpu.memory_space<vmem>>, %arg10: memref<1x16xf32, #tpu.memory_space<vmem>>, %arg11: memref<8x16xf32, #tpu.memory_space<vmem>>, %arg12: memref<1x1xf32, #tpu.memory_space<vmem>>, %arg13: memref<1x128xf32, #tpu.memory_space<vmem>>) attributes {dimension_semantics = [#tpu.dimension_semantics<arbitrary>], iteration_bounds = array<i64: 1>, scalar_prefetch = 0 : i64, scratch_operands = 0 : i64, tpu.core_type = #tpu.core_type<tc>, window_params = [{pipeline_mode = #tpu.pipeline_mode<synchronous>, transform_indices = @transform_0, window_bounds = array<i64: 128, 8>}, {pipeline_mode = #tpu.pipeline_mode<synchronous>, transform_indices = @transform_1, window_bounds = array<i64: 128, 128>}, {pipeline_mode = #tpu.pipeline_mode<synchronous>, transform_indices = @transform_2, window_bounds = array<i64: 8, 32>}, {pipeline_mode = #tpu.pipeline_mode<synchronous>, transform_indices = @transform_3, window_bounds = array<i64: 1, 32>}, {pipeline_mode = #tpu.pipeline_mode<synchronous>, transform_indices = @transform_4, window_bounds = array<i64: 32, 32>}, {pipeline_mode = #tpu.pipeline_mode<synchronous>, transform_indices = @transform_5, window_bounds = array<i64: 1, 32>}, {pipeline_mode = #tpu.pipeline_mode<synchronous>, transform_indices = @transform_6, window_bounds = array<i64: 32, 32>}, {pipeline_mode = #tpu.pipeline_mode<synchronous>, transform_indices = @transform_7, window_bounds = array<i64: 1, 32>}, {pipeline_mode = #tpu.pipeline_mode<synchronous>, transform_indices = @transform_8, window_bounds = array<i64: 32, 16>}, {pipeline_mode = #tpu.pipeline_mode<synchronous>, transform_indices = @transform_9, window_bounds = array<i64: 1, 16>}, {pipeline_mode = #tpu.pipeline_mode<synchronous>, transform_indices = @transform_10, window_bounds = array<i64: 8, 16>}, {pipeline_mode = #tpu.pipeline_mode<synchronous>, transform_indices = @transform_11, window_bounds = array<i64: 1, 1>}, {pipeline_mode = #tpu.pipeline_mode<synchronous>, transform_indices = @transform_12, window_bounds = array<i64: 1, 128>}]} {
    %c0 = arith.constant 0 : index
    %c0_0 = arith.constant 0 : index
    %0 = vector.load %arg2[%c0, %c0_0] : memref<128x128xi8, #tpu.memory_space<vmem>>, vector<128x128xi8>
    %1 = arith.sitofp %0 : vector<128x128xi8> to vector<128x128xf32>
    %2 = arith.truncf %1 : vector<128x128xf32> to vector<128x128xbf16>
    %c0_1 = arith.constant 0 : index
    %c0_2 = arith.constant 0 : index
    %3 = vector.load %arg1[%c0_1, %c0_2] : memref<128x8xf32, #tpu.memory_space<vmem>>, vector<128x8xf32>
    %c0_3 = arith.constant 0 : index
    %c0_4 = arith.constant 0 : index
    %4 = vector.load %arg3[%c0_3, %c0_4] : memref<8x32xf32, #tpu.memory_space<vmem>>, vector<8x32xf32>
    %cst = arith.constant dense<0.000000e+00> : vector<128x32xf32>
    %5 = tpu.matmul %3, %4, %cst {dimension_numbers = #tpu.dot_dimension_numbers<[1], [0], [0], [1], [0, 0, 1, 1], [], []>} : vector<128x8xf32>, vector<8x32xf32>, vector<128x32xf32> -> vector<128x32xf32>
    %c0_5 = arith.constant 0 : index
    %c0_6 = arith.constant 0 : index
    %6 = vector.load %arg4[%c0_5, %c0_6] : memref<1x32xf32, #tpu.memory_space<vmem>>, vector<1x32xf32>
    %7 = vector.broadcast %6 : vector<1x32xf32> to vector<128x32xf32>
    %8 = arith.addf %5, %7 : vector<128x32xf32>
    %cst_7 = arith.constant 0.000000e+00 : f32
    %9 = vector.broadcast %cst_7 : f32 to vector<128x32xf32>
    %10 = arith.maximumf %8, %9 : vector<128x32xf32>
    %11 = arith.truncf %10 : vector<128x32xf32> to vector<128x32xbf16>
    %cst_8 = arith.constant dense<0.000000e+00> : vector<128x32xf32>
    %12 = tpu.matmul %2, %11, %cst_8 {dimension_numbers = #tpu.dot_dimension_numbers<[1], [0], [0], [1], [0, 0, 1, 1], [], []>} : vector<128x128xbf16>, vector<128x32xbf16>, vector<128x32xf32> -> vector<128x32xf32>
    %13 = arith.addf %12, %10 : vector<128x32xf32>
    %14 = arith.truncf %13 : vector<128x32xf32> to vector<128x32xbf16>
    %c0_9 = arith.constant 0 : index
    %c0_10 = arith.constant 0 : index
    %15 = vector.load %arg5[%c0_9, %c0_10] : memref<32x32xbf16, #tpu.memory_space<vmem>>, vector<32x32xbf16>
    %cst_11 = arith.constant dense<0.000000e+00> : vector<128x32xf32>
    %16 = tpu.matmul %14, %15, %cst_11 {dimension_numbers = #tpu.dot_dimension_numbers<[1], [0], [0], [1], [0, 0, 1, 1], [], []>} : vector<128x32xbf16>, vector<32x32xbf16>, vector<128x32xf32> -> vector<128x32xf32>
    %c0_12 = arith.constant 0 : index
    %c0_13 = arith.constant 0 : index
    %17 = vector.load %arg6[%c0_12, %c0_13] : memref<1x32xf32, #tpu.memory_space<vmem>>, vector<1x32xf32>
    %18 = vector.broadcast %17 : vector<1x32xf32> to vector<128x32xf32>
    %19 = arith.addf %16, %18 : vector<128x32xf32>
    %cst_14 = arith.constant 0.000000e+00 : f32
    %20 = vector.broadcast %cst_14 : f32 to vector<128x32xf32>
    %21 = arith.maximumf %19, %20 : vector<128x32xf32>
    %22 = arith.truncf %21 : vector<128x32xf32> to vector<128x32xbf16>
    %cst_15 = arith.constant dense<0.000000e+00> : vector<128x32xf32>
    %23 = tpu.matmul %2, %22, %cst_15 {dimension_numbers = #tpu.dot_dimension_numbers<[1], [0], [0], [1], [0, 0, 1, 1], [], []>} : vector<128x128xbf16>, vector<128x32xbf16>, vector<128x32xf32> -> vector<128x32xf32>
    %24 = arith.addf %23, %21 : vector<128x32xf32>
    %25 = arith.truncf %24 : vector<128x32xf32> to vector<128x32xbf16>
    %c0_16 = arith.constant 0 : index
    %c0_17 = arith.constant 0 : index
    %26 = vector.load %arg7[%c0_16, %c0_17] : memref<32x32xbf16, #tpu.memory_space<vmem>>, vector<32x32xbf16>
    %cst_18 = arith.constant dense<0.000000e+00> : vector<128x32xf32>
    %27 = tpu.matmul %25, %26, %cst_18 {dimension_numbers = #tpu.dot_dimension_numbers<[1], [0], [0], [1], [0, 0, 1, 1], [], []>} : vector<128x32xbf16>, vector<32x32xbf16>, vector<128x32xf32> -> vector<128x32xf32>
    %c0_19 = arith.constant 0 : index
    %c0_20 = arith.constant 0 : index
    %28 = vector.load %arg8[%c0_19, %c0_20] : memref<1x32xf32, #tpu.memory_space<vmem>>, vector<1x32xf32>
    %29 = vector.broadcast %28 : vector<1x32xf32> to vector<128x32xf32>
    %30 = arith.addf %27, %29 : vector<128x32xf32>
    %cst_21 = arith.constant 0.000000e+00 : f32
    %31 = vector.broadcast %cst_21 : f32 to vector<128x32xf32>
    %32 = arith.maximumf %30, %31 : vector<128x32xf32>
    %33 = arith.truncf %32 : vector<128x32xf32> to vector<128x32xbf16>
    %c0_22 = arith.constant 0 : index
    %c0_23 = arith.constant 0 : index
    %34 = vector.load %arg9[%c0_22, %c0_23] : memref<32x16xbf16, #tpu.memory_space<vmem>>, vector<32x16xbf16>
    %cst_24 = arith.constant dense<0.000000e+00> : vector<128x16xf32>
    %35 = tpu.matmul %33, %34, %cst_24 {dimension_numbers = #tpu.dot_dimension_numbers<[1], [0], [0], [1], [0, 0, 1, 1], [], []>} : vector<128x32xbf16>, vector<32x16xbf16>, vector<128x16xf32> -> vector<128x16xf32>
    %c0_25 = arith.constant 0 : index
    %c0_26 = arith.constant 0 : index
    %36 = vector.load %arg10[%c0_25, %c0_26] : memref<1x16xf32, #tpu.memory_space<vmem>>, vector<1x16xf32>
    %37 = vector.broadcast %36 : vector<1x16xf32> to vector<128x16xf32>
    %38 = arith.addf %35, %37 : vector<128x16xf32>
    %cst_27 = arith.constant 0.000000e+00 : f32
    %39 = vector.broadcast %cst_27 : f32 to vector<128x16xf32>
    %40 = arith.maximumf %38, %39 : vector<128x16xf32>
    %c0_28 = arith.constant 0 : index
    %c0_29 = arith.constant 0 : index
    %41 = vector.load %arg11[%c0_28, %c0_29] : memref<8x16xf32, #tpu.memory_space<vmem>>, vector<8x16xf32>
    %cst_30 = arith.constant dense<0.000000e+00> : vector<8x128xf32>
    %42 = tpu.matmul %41, %40, %cst_30 {dimension_numbers = #tpu.dot_dimension_numbers<[1], [1], [0], [0], [0, 0, 1, 0], [], []>} : vector<8x16xf32>, vector<128x16xf32>, vector<8x128xf32> -> vector<8x128xf32>
    %43 = vector.extract_strided_slice %42 {offsets = [0, 0], sizes = [1, 128], strides = [1, 1]} : vector<8x128xf32> to vector<1x128xf32>
    %c0_31 = arith.constant 0 : index
    %c0_32 = arith.constant 0 : index
    %44 = vector.load %arg12[%c0_31, %c0_32] : memref<1x1xf32, #tpu.memory_space<vmem>>, vector<1x1xf32>
    %45 = vector.broadcast %44 : vector<1x1xf32> to vector<1x128xf32>
    %46 = arith.addf %43, %45 : vector<1x128xf32>
    %47 = arith.negf %46 : vector<1x128xf32>
    %48 = math.exp %47 : vector<1x128xf32>
    %cst_33 = arith.constant 1.000000e+00 : f32
    %49 = vector.broadcast %cst_33 : f32 to vector<1x128xf32>
    %50 = arith.addf %49, %48 : vector<1x128xf32>
    %51 = arith.divf %49, %50 : vector<1x128xf32>
    %c0_34 = arith.constant 0 : index
    %c0_35 = arith.constant 0 : index
    %52 = vector.load %arg13[%c0_34, %c0_35] : memref<1x128xf32, #tpu.memory_space<vmem>>, vector<1x128xf32>
    tpu.vector_store %arg13[%c0_34, %c0_35], %51 {strides = array<i32>} : memref<1x128xf32, #tpu.memory_space<vmem>>, vector<1x128xf32>,
    return
  }
  func.func @transform_0(%arg0: i32) -> (i32, i32) {
    %c0_i32 = arith.constant 0 : i32
    %c0_i32_0 = arith.constant 0 : i32
    %c0_i32_1 = arith.constant 0 : i32
    return %c0_i32, %c0_i32_0 : i32, i32
  }
  func.func @transform_1(%arg0: i32) -> (i32, i32) {
    %c0_i32 = arith.constant 0 : i32
    %c0_i32_0 = arith.constant 0 : i32
    %c0_i32_1 = arith.constant 0 : i32
    return %c0_i32, %c0_i32_0 : i32, i32
  }
  func.func @transform_2(%arg0: i32) -> (i32, i32) {
    %c0_i32 = arith.constant 0 : i32
    %c0_i32_0 = arith.constant 0 : i32
    %c0_i32_1 = arith.constant 0 : i32
    return %c0_i32, %c0_i32_0 : i32, i32
  }
  func.func @transform_3(%arg0: i32) -> (i32, i32) {
    %c0_i32 = arith.constant 0 : i32
    %c0_i32_0 = arith.constant 0 : i32
    %c0_i32_1 = arith.constant 0 : i32
    return %c0_i32, %c0_i32_0 : i32, i32
  }
  func.func @transform_4(%arg0: i32) -> (i32, i32) {
    %c0_i32 = arith.constant 0 : i32
    %c0_i32_0 = arith.constant 0 : i32
    %c0_i32_1 = arith.constant 0 : i32
    return %c0_i32, %c0_i32_0 : i32, i32
  }
  func.func @transform_5(%arg0: i32) -> (i32, i32) {
    %c0_i32 = arith.constant 0 : i32
    %c0_i32_0 = arith.constant 0 : i32
    %c0_i32_1 = arith.constant 0 : i32
    return %c0_i32, %c0_i32_0 : i32, i32
  }
  func.func @transform_6(%arg0: i32) -> (i32, i32) {
    %c0_i32 = arith.constant 0 : i32
    %c0_i32_0 = arith.constant 0 : i32
    %c0_i32_1 = arith.constant 0 : i32
    return %c0_i32, %c0_i32_0 : i32, i32
  }
  func.func @transform_7(%arg0: i32) -> (i32, i32) {
    %c0_i32 = arith.constant 0 : i32
    %c0_i32_0 = arith.constant 0 : i32
    %c0_i32_1 = arith.constant 0 : i32
    return %c0_i32, %c0_i32_0 : i32, i32
  }
  func.func @transform_8(%arg0: i32) -> (i32, i32) {
    %c0_i32 = arith.constant 0 : i32
    %c0_i32_0 = arith.constant 0 : i32
    %c0_i32_1 = arith.constant 0 : i32
    return %c0_i32, %c0_i32_0 : i32, i32
  }
  func.func @transform_9(%arg0: i32) -> (i32, i32) {
    %c0_i32 = arith.constant 0 : i32
    %c0_i32_0 = arith.constant 0 : i32
    %c0_i32_1 = arith.constant 0 : i32
    return %c0_i32, %c0_i32_0 : i32, i32
  }
  func.func @transform_10(%arg0: i32) -> (i32, i32) {
    %c0_i32 = arith.constant 0 : i32
    %c0_i32_0 = arith.constant 0 : i32
    %c0_i32_1 = arith.constant 0 : i32
    return %c0_i32, %c0_i32_0 : i32, i32
  }
  func.func @transform_11(%arg0: i32) -> (i32, i32) {
    %c0_i32 = arith.constant 0 : i32
    %c0_i32_0 = arith.constant 0 : i32
    %c0_i32_1 = arith.constant 0 : i32
    return %c0_i32, %c0_i32_0 : i32, i32
  }
  func.func @transform_12(%arg0: i32) -> (i32, i32) {
    %c0_i32 = arith.constant 0 : i32
    %c0_i32_0 = arith.constant 0 : i32
    %c0_i32_1 = arith.constant 0 : i32
    return %c0_i32, %c0_i32_0 : i32, i32
  }
}

</mosaic_0001>

<llo_original>
// kernel: tpu_custom_call.1
$region0: #{tpu_custom_call.1}
  #allocation0 [shape = 'u32[]', space=smem, size = 0x4, offset = 0x4, fixed_abs, tag = 'smem constant byte address 0x4 - core index']
  #allocation1 [shape = 'u32[144,128]{1,0:T(1,128)}', space=vmem, size = 0x12000, scoped, tag = 'internal scratch']
  #allocation2 [shape = 'f32[1,1]{1,0:T(1,128)S(1)}', space=vmem, size = 0x200, scoped, tag = 'scoped memory for tpu_custom_call.1']
  %s0 = inlined_call_operand.vmem [shape: f32[128,8], index: 0, kind: input, shape index: {}]
  %s1 = inlined_call_operand.vmem [shape: s8[128,128], index: 1, kind: input, shape index: {}]
  %s2 = inlined_call_operand.vmem [shape: f32[8,32], index: 2, kind: input, shape index: {}]
  %s3 = inlined_call_operand.vmem [shape: f32[1,32], index: 3, kind: input, shape index: {}]
  %s4 = inlined_call_operand.vmem [shape: bf16[32,32], index: 4, kind: input, shape index: {}]
  %s5 = inlined_call_operand.vmem [shape: f32[1,32], index: 5, kind: input, shape index: {}]
  %s6 = inlined_call_operand.vmem [shape: bf16[32,32], index: 6, kind: input, shape index: {}]
  %s7 = inlined_call_operand.vmem [shape: f32[1,32], index: 7, kind: input, shape index: {}]
  %s8 = inlined_call_operand.vmem [shape: bf16[32,16], index: 8, kind: input, shape index: {}]
  %s9 = inlined_call_operand.vmem [shape: f32[1,16], index: 9, kind: input, shape index: {}]
  %s10 = inlined_call_operand.vmem [shape: f32[8,16], index: 10, kind: input, shape index: {}]
  %s11 = inlined_call_operand.<no memory space> [shape: f32[1,1], index: 11, kind: input, shape index: {}]
  %s12 = inlined_call_operand.hbm [shape: f32[1,128], index: 12, kind: output, shape index: {}]
  %s13 = sld [smem:[#allocation0]]
  $region58: #{tpu_custom_call.1} parent=0
    _
  %s15 = ssub.s32 1, %s13
  %s16 = scalar_select 0, %s15, %s13
  %v17 = vstv %s11
  %18 = vst [vmem:[#allocation2] sm:$0x1] %v17
  $region1: #{tpu_custom_call.1} parent=0
    #allocation3 [shape = 'u8[512]{0}', space=vmem, size = 0x400, scoped, tag = 'output window, operand 0, single buffered']
    #allocation4 [shape = 's32[1]{0}', space=sflag, size = 0x4, scoped, tag = 'scoped memory for tpu_custom_call.1']
    %19 = vsyncpa [#allocation4], 0
    // Predicated region
    $region2: #{tpu_custom_call.1} parent=1 // pred_check
      _
    $region3: #{tpu_custom_call.1} parent=1 // pred_check_branch
      %21 = sbr.rel (0) target = $region5
    $region4: #{tpu_custom_call.1} parent=1 // pred_region
      _
    $region5: #{tpu_custom_call.1} parent=1 // pred_fallthru
      _
    // Predicated region
    $region6: #{tpu_custom_call.1} parent=1 // pred_check
      _
    $region7: #{tpu_custom_call.1} parent=1 // pred_check_branch
      %23 = sbr.rel (0) target = $region9
    $region8: #{tpu_custom_call.1} parent=1 // pred_region
      _
    $region9: #{tpu_custom_call.1} parent=1 // pred_fallthru
      _
    // Predicated region
    $region10: #{tpu_custom_call.1} parent=1 // pred_check
      _
    $region11: #{tpu_custom_call.1} parent=1 // pred_check_branch
      %25 = sbr.rel (0) target = $region13
    $region12: #{tpu_custom_call.1} parent=1 // pred_region
      _
    $region13: #{tpu_custom_call.1} parent=1 // pred_fallthru
      _
    // Predicated region
    $region14: #{tpu_custom_call.1} parent=1 // pred_check
      _
    $region15: #{tpu_custom_call.1} parent=1 // pred_check_branch
      %27 = sbr.rel (0) target = $region17
    $region16: #{tpu_custom_call.1} parent=1 // pred_region
      _
    $region17: #{tpu_custom_call.1} parent=1 // pred_fallthru
      _
    // Predicated region
    $region18: #{tpu_custom_call.1} parent=1 // pred_check
      _
    $region19: #{tpu_custom_call.1} parent=1 // pred_check_branch
      %29 = sbr.rel (0) target = $region21
    $region20: #{tpu_custom_call.1} parent=1 // pred_region
      _
    $region21: #{tpu_custom_call.1} parent=1 // pred_fallthru
      _
    // Predicated region
    $region22: #{tpu_custom_call.1} parent=1 // pred_check
      _
    $region23: #{tpu_custom_call.1} parent=1 // pred_check_branch
      %31 = sbr.rel (0) target = $region25
    $region24: #{tpu_custom_call.1} parent=1 // pred_region
      _
    $region25: #{tpu_custom_call.1} parent=1 // pred_fallthru
      _
    // Predicated region
    $region26: #{tpu_custom_call.1} parent=1 // pred_check
      _
    $region27: #{tpu_custom_call.1} parent=1 // pred_check_branch
      %33 = sbr.rel (0) target = $region29
    $region28: #{tpu_custom_call.1} parent=1 // pred_region
      _
    $region29: #{tpu_custom_call.1} parent=1 // pred_fallthru
      _
    // Predicated region
    $region30: #{tpu_custom_call.1} parent=1 // pred_check
      _
    $region31: #{tpu_custom_call.1} parent=1 // pred_check_branch
      %35 = sbr.rel (0) target = $region33
    $region32: #{tpu_custom_call.1} parent=1 // pred_region
      _
    $region33: #{tpu_custom_call.1} parent=1 // pred_fallthru
      _
    // Predicated region
    $region34: #{tpu_custom_call.1} parent=1 // pred_check
      _
    $region35: #{tpu_custom_call.1} parent=1 // pred_check_branch
      %37 = sbr.rel (0) target = $region37
    $region36: #{tpu_custom_call.1} parent=1 // pred_region
      _
    $region37: #{tpu_custom_call.1} parent=1 // pred_fallthru
      _
    // Predicated region
    $region38: #{tpu_custom_call.1} parent=1 // pred_check
      _
    $region39: #{tpu_custom_call.1} parent=1 // pred_check_branch
      %39 = sbr.rel (0) target = $region41
    $region40: #{tpu_custom_call.1} parent=1 // pred_region
      _
    $region41: #{tpu_custom_call.1} parent=1 // pred_fallthru
      _
    // Predicated region
    $region42: #{tpu_custom_call.1} parent=1 // pred_check
      _
    $region43: #{tpu_custom_call.1} parent=1 // pred_check_branch
      %41 = sbr.rel (0) target = $region45
    $region44: #{tpu_custom_call.1} parent=1 // pred_region
      _
    $region45: #{tpu_custom_call.1} parent=1 // pred_fallthru
      _
    // Predicated region
    $region46: #{tpu_custom_call.1} parent=1 // pred_check
      _
    $region47: #{tpu_custom_call.1} parent=1 // pred_check_branch
      %43 = sbr.rel (0) target = $region49
    $region48: #{tpu_custom_call.1} parent=1 // pred_region
      _
    $region49: #{tpu_custom_call.1} parent=1 // pred_fallthru
      _
    %v45 = vld [vmem:[%s1] sm:$0xff]
    %v46 = vld [vmem:[%s1 + $0x8] sm:$0xff]
    %v47 = vld [vmem:[%s1 + $0x10] sm:$0xff]
    %v48 = vld [vmem:[%s1 + $0x18] sm:$0xff]
    %v49 = vunpack.c.l.s8.bf16 %v45
    %v50 = vunpack.c.h.s8.bf16 %v45
    %v51 = vunpack.c.l.s8.bf16 %v46
    %v52 = vunpack.c.h.s8.bf16 %v46
    %v53 = vunpack.c.l.s8.bf16 %v47
    %v54 = vunpack.c.h.s8.bf16 %v47
    %v55 = vunpack.c.l.s8.bf16 %v48
    %v56 = vunpack.c.h.s8.bf16 %v48
    %v57 = vld [vmem:[%s0] sm:$0xff]
    %v58 = vld [vmem:[%s0 + $0x8] sm:$0xff]
    %v59 = vld [vmem:[%s0 + $0x10] sm:$0xff]
    %v60 = vld [vmem:[%s0 + $0x18] sm:$0xff]
    %v61 = vld [vmem:[%s0 + $0x20] sm:$0xff]
    %v62 = vld [vmem:[%s0 + $0x28] sm:$0xff]
    %v63 = vld [vmem:[%s0 + $0x30] sm:$0xff]
    %v64 = vld [vmem:[%s0 + $0x38] sm:$0xff]
    %v65 = vld [vmem:[%s0 + $0x40] sm:$0xff]
    %v66 = vld [vmem:[%s0 + $0x48] sm:$0xff]
    %v67 = vld [vmem:[%s0 + $0x50] sm:$0xff]
    %v68 = vld [vmem:[%s0 + $0x58] sm:$0xff]
    %v69 = vld [vmem:[%s0 + $0x60] sm:$0xff]
    %v70 = vld [vmem:[%s0 + $0x68] sm:$0xff]
    %v71 = vld [vmem:[%s0 + $0x70] sm:$0xff]
    %v72 = vld [vmem:[%s0 + $0x78] sm:$0xff]
    %v73 = vld [vmem:[%s2] sm:$0xff]
    %v74 = vld [vmem:[%s3] sm:$0x1]
    %v76 = vlaneseq
    %v77 = vshrl.u32 %v76, 7
    %v78 = vsub.s32 0, %v77
    %v79 = vrot.slane %v74, %v78
    %vm81 = vcmask 64512
    %v83 = vsel %vm81, %v57, 0
    %v86 = vsel %vm81, %v58, 0
    %v89 = vsel %vm81, %v59, 0
    %v92 = vsel %vm81, %v60, 0
    %v95 = vsel %vm81, %v61, 0
    %v98 = vsel %vm81, %v62, 0
    %v101 = vsel %vm81, %v63, 0
    %v104 = vsel %vm81, %v64, 0
    %v107 = vsel %vm81, %v65, 0
    %v110 = vsel %vm81, %v66, 0
    %v113 = vsel %vm81, %v67, 0
    %v116 = vsel %vm81, %v68, 0
    %v119 = vsel %vm81, %v69, 0
    %v122 = vsel %vm81, %v70, 0
    %v125 = vsel %vm81, %v71, 0
    %v128 = vsel %vm81, %v72, 0
    %130 = vmatprep.subr.mxu0 0.0
    %131 = vmatpush1.msra.mxu0 %v73
    %132 = vmatprep.subr.mxu0 0.0
    %133 = vmatpush1.msra.mxu0 0.0
    %134 = vmatprep.subr.mxu0 0.0
    %135 = vmatpush1.msra.mxu0 0.0
    %136 = vmatprep.subr.mxu0 0.0
    %137 = vmatpush1.msra.mxu0 0.0
    %138 = vmatprep.subr.mxu0 0.0
    %139 = vmatpush1.msra.mxu0 0.0
    %140 = vmatprep.subr.mxu0 0.0
    %141 = vmatpush1.msra.mxu0 0.0
    %142 = vmatprep.subr.mxu0 0.0
    %143 = vmatpush1.msra.mxu0 0.0
    %144 = vmatprep.subr.mxu0 0.0
    %145 = vmatpush1.msra.mxu0 0.0
    %146 = vmatprep.subr.mxu0 0.0
    %147 = vmatpush1.msra.mxu0 0.0
    %148 = vmatprep.subr.mxu0 0.0
    %149 = vmatpush1.msra.mxu0 0.0
    %150 = vmatprep.subr.mxu0 0.0
    %151 = vmatpush1.msra.mxu0 0.0
    %152 = vmatprep.subr.mxu0 0.0
    %153 = vmatpush1.msra.mxu0 0.0
    %154 = vmatprep.subr.mxu0 0.0
    %155 = vmatpush1.msra.mxu0 0.0
    %156 = vmatprep.subr.mxu0 0.0
    %157 = vmatpush1.msra.mxu0 0.0
    %158 = vmatprep.subr.mxu0 0.0
    %159 = vmatpush1.msra.mxu0 0.0
    %160 = vmatprep.subr.mxu0 0.0
    %161 = vmatpush1.msra.mxu0 0.0
    %162 = vmatprep.subr.mxu0 0.0
    %163 = vmatpush1.msra.mxu0 0.0
    %164 = vmatprep.subr.mxu0 0.0
    %165 = vmatpush1.msra.mxu0 0.0
    %166 = vmatprep.subr.mxu0 0.0
    %167 = vmatpush1.msra.mxu0 0.0
    %168 = vmatprep.subr.mxu0 0.0
    %169 = vmatpush1.msra.mxu0 0.0
    %170 = vmatprep.subr.mxu0 0.0
    %171 = vmatpush1.msra.mxu0 0.0
    %172 = vmatprep.subr.mxu0 0.0
    %173 = vmatpush1.msra.mxu0 0.0
    %174 = vmatprep.subr.mxu0 0.0
    %175 = vmatpush1.msra.mxu0 0.0
    %176 = vmatprep.subr.mxu0 0.0
    %177 = vmatpush1.msra.mxu0 0.0
    %178 = vmatprep.subr.mxu0 0.0
    %179 = vmatpush1.msra.mxu0 0.0
    %180 = vmatprep.subr.mxu0 0.0
    %181 = vmatpush1.msra.mxu0 0.0
    %182 = vmatprep.subr.mxu0 0.0
    %183 = vmatpush1.msra.mxu0 0.0
    %184 = vmatprep.subr.mxu0 0.0
    %185 = vmatpush1.msra.mxu0 0.0
    %186 = vmatprep.subr.mxu0 0.0
    %187 = vmatpush1.msra.mxu0 0.0
    %188 = vmatprep.subr.mxu0 0.0
    %189 = vmatpush1.msra.mxu0 0.0
    %190 = vmatprep.subr.mxu0 0.0
    %191 = vmatpush1.msra.mxu0 0.0
    %192 = vmatprep.subr.mxu0 0.0
    %193 = vmatpush1.msra.mxu0 0.0
    %194 = vmatprep.mubr.f32.mxu0 0.0
    %195 = vmatmul.mubr.f32.gmra.mrb[0].mxu0 %v83
    %v196 = vpop.f32.mrb[0].mxu0
    %v197 = vadd.f32 %v79, %v196
    %v198 = vpop.f32.mrb[0].mxu0
    %199 = vmatprep.mubr.f32.mxu0 0.0
    %200 = vmatmul.mubr.f32.gmra.mrb[0].mxu0 %v86
    %v201 = vpop.f32.mrb[0].mxu0
    %v202 = vadd.f32 %v79, %v201
    %v203 = vpop.f32.mrb[0].mxu0
    %204 = vmatprep.mubr.f32.mxu0 0.0
    %205 = vmatmul.mubr.f32.gmra.mrb[0].mxu0 %v89
    %v206 = vpop.f32.mrb[0].mxu0
    %v207 = vadd.f32 %v79, %v206
    %v208 = vpop.f32.mrb[0].mxu0
    %209 = vmatprep.mubr.f32.mxu0 0.0
    %210 = vmatmul.mubr.f32.gmra.mrb[0].mxu0 %v92
    %v211 = vpop.f32.mrb[0].mxu0
    %v212 = vadd.f32 %v79, %v211
    %v213 = vpop.f32.mrb[0].mxu0
    %214 = vmatprep.mubr.f32.mxu0 0.0
    %215 = vmatmul.mubr.f32.gmra.mrb[0].mxu0 %v95
    %v216 = vpop.f32.mrb[0].mxu0
    %v217 = vadd.f32 %v79, %v216
    %v218 = vpop.f32.mrb[0].mxu0
    %219 = vmatprep.mubr.f32.mxu0 0.0
    %220 = vmatmul.mubr.f32.gmra.mrb[0].mxu0 %v98
    %v221 = vpop.f32.mrb[0].mxu0
    %v222 = vadd.f32 %v79, %v221
    %v223 = vpop.f32.mrb[0].mxu0
    %224 = vmatprep.mubr.f32.mxu0 0.0
    %225 = vmatmul.mubr.f32.gmra.mrb[0].mxu0 %v101
    %v226 = vpop.f32.mrb[0].mxu0
    %v227 = vadd.f32 %v79, %v226
    %v228 = vpop.f32.mrb[0].mxu0
    %229 = vmatprep.mubr.f32.mxu0 0.0
    %230 = vmatmul.mubr.f32.gmra.mrb[0].mxu0 %v104
    %v231 = vpop.f32.mrb[0].mxu0
    %v232 = vadd.f32 %v79, %v231
    %v233 = vpop.f32.mrb[0].mxu0
    %234 = vmatprep.mubr.f32.mxu0 0.0
    %235 = vmatmul.mubr.f32.gmra.mrb[0].mxu0 %v107
    %v236 = vpop.f32.mrb[0].mxu0
    %v237 = vadd.f32 %v79, %v236
    %v238 = vpop.f32.mrb[0].mxu0
    %239 = vmatprep.mubr.f32.mxu0 0.0
    %240 = vmatmul.mubr.f32.gmra.mrb[0].mxu0 %v110
    %v241 = vpop.f32.mrb[0].mxu0
    %v242 = vadd.f32 %v79, %v241
    %v243 = vpop.f32.mrb[0].mxu0
    %244 = vmatprep.mubr.f32.mxu0 0.0
    %245 = vmatmul.mubr.f32.gmra.mrb[0].mxu0 %v113
    %v246 = vpop.f32.mrb[0].mxu0
    %v247 = vadd.f32 %v79, %v246
    %v248 = vpop.f32.mrb[0].mxu0
    %249 = vmatprep.mubr.f32.mxu0 0.0
    %250 = vmatmul.mubr.f32.gmra.mrb[0].mxu0 %v116
    %v251 = vpop.f32.mrb[0].mxu0
    %v252 = vadd.f32 %v79, %v251
    %v253 = vpop.f32.mrb[0].mxu0
    %254 = vmatprep.mubr.f32.mxu0 0.0
    %255 = vmatmul.mubr.f32.gmra.mrb[0].mxu0 %v119
    %v256 = vpop.f32.mrb[0].mxu0
    %v257 = vadd.f32 %v79, %v256
    %v258 = vpop.f32.mrb[0].mxu0
    %259 = vmatprep.mubr.f32.mxu0 0.0
    %260 = vmatmul.mubr.f32.gmra.mrb[0].mxu0 %v122
    %v261 = vpop.f32.mrb[0].mxu0
    %v262 = vadd.f32 %v79, %v261
    %v263 = vpop.f32.mrb[0].mxu0
    %264 = vmatprep.mubr.f32.mxu0 0.0
    %265 = vmatmul.mubr.f32.gmra.mrb[0].mxu0 %v125
    %v266 = vpop.f32.mrb[0].mxu0
    %v267 = vadd.f32 %v79, %v266
    %v268 = vpop.f32.mrb[0].mxu0
    %269 = vmatprep.mubr.f32.mxu0 0.0
    %270 = vmatmul.mubr.f32.gmra.mrb[0].mxu0 %v128
    %v271 = vpop.f32.mrb[0].mxu0
    %v272 = vadd.f32 %v79, %v271
    %v273 = vpop.f32.mrb[0].mxu0
    %274 = vdwg.mxu0
    %v275 = vmax.f32 %v197, 0.0
    %v276 = vmax.f32 %v202, 0.0
    %v277 = vmax.f32 %v207, 0.0
    %v278 = vmax.f32 %v212, 0.0
    %v279 = vmax.f32 %v217, 0.0
    %v280 = vmax.f32 %v222, 0.0
    %v281 = vmax.f32 %v227, 0.0
    %v282 = vmax.f32 %v232, 0.0
    %v283 = vmax.f32 %v237, 0.0
    %v284 = vmax.f32 %v242, 0.0
    %v285 = vmax.f32 %v247, 0.0
    %v286 = vmax.f32 %v252, 0.0
    %v287 = vmax.f32 %v257, 0.0
    %v288 = vmax.f32 %v262, 0.0
    %v289 = vmax.f32 %v267, 0.0
    %v290 = vmax.f32 %v272, 0.0
    %v291 = vpack.c.bf16 %v276, %v275
    %v292 = vpack.c.bf16 %v278, %v277
    %v293 = vpack.c.bf16 %v280, %v279
    %v294 = vpack.c.bf16 %v282, %v281
    %v295 = vpack.c.bf16 %v284, %v283
    %v296 = vpack.c.bf16 %v286, %v285
    %v297 = vpack.c.bf16 %v288, %v287
    %v298 = vpack.c.bf16 %v290, %v289
    %299 = vmatprep.subr.bf16.mxu0 0
    %300 = vmatpush1.bf16.msra.mxu0 %v291
    %301 = vmatprep.subr.bf16.mxu0 0
    %302 = vmatpush1.bf16.msra.mxu0 %v292
    %303 = vmatprep.subr.bf16.mxu0 0
    %304 = vmatpush1.bf16.msra.mxu0 %v293
    %305 = vmatprep.subr.bf16.mxu0 0
    %306 = vmatpush1.bf16.msra.mxu0 %v294
    %307 = vmatprep.subr.bf16.mxu0 0
    %308 = vmatpush1.bf16.msra.mxu0 %v295
    %309 = vmatprep.subr.bf16.mxu0 0
    %310 = vmatpush1.bf16.msra.mxu0 %v296
    %311 = vmatprep.subr.bf16.mxu0 0
    %312 = vmatpush1.bf16.msra.mxu0 %v297
    %313 = vmatprep.subr.bf16.mxu0 0
    %314 = vmatpush1.bf16.msra.mxu0 %v298
    %315 = vmatprep.subr.bf16.mxu0 0
    %316 = vmatpush1.bf16.msra.mxu0 0
    %317 = vmatprep.subr.bf16.mxu0 0
    %318 = vmatpush1.bf16.msra.mxu0 0
    %319 = vmatprep.subr.bf16.mxu0 0
    %320 = vmatpush1.bf16.msra.mxu0 0
    %321 = vmatprep.subr.bf16.mxu0 0
    %322 = vmatpush1.bf16.msra.mxu0 0
    %323 = vmatprep.subr.bf16.mxu0 0
    %324 = vmatpush1.bf16.msra.mxu0 0
    %325 = vmatprep.subr.bf16.mxu0 0
    %326 = vmatpush1.bf16.msra.mxu0 0
    %327 = vmatprep.subr.bf16.mxu0 0
    %328 = vmatpush1.bf16.msra.mxu0 0
    %329 = vmatprep.subr.bf16.mxu0 0
    %330 = vmatpush1.bf16.msra.mxu0 0
    %331 = vmatprep.mubr.bf16.mxu0 0
    %332 = vmatmul.mubr.bf16.gmra.mrb[0].mxu0 %v49
    %v333 = vpop.f32.mrb[0].mxu0
    %v334 = vadd.f32 %v275, %v333
    %v335 = vpop.f32.mrb[0].mxu0
    %v336 = vpop.f32.mrb[0].mxu0
    %v337 = vadd.f32 %v276, %v336
    %v338 = vpop.f32.mrb[0].mxu0
    %339 = vmatprep.mubr.bf16.mxu0 0
    %340 = vmatmul.mubr.bf16.gmra.mrb[0].mxu0 %v50
    %v341 = vpop.f32.mrb[0].mxu0
    %v342 = vadd.f32 %v277, %v341
    %v343 = vpop.f32.mrb[0].mxu0
    %v344 = vpop.f32.mrb[0].mxu0
    %v345 = vadd.f32 %v278, %v344
    %v346 = vpop.f32.mrb[0].mxu0
    %347 = vmatprep.mubr.bf16.mxu0 0
    %348 = vmatmul.mubr.bf16.gmra.mrb[0].mxu0 %v51
    %v349 = vpop.f32.mrb[0].mxu0
    %v350 = vadd.f32 %v279, %v349
    %v351 = vpop.f32.mrb[0].mxu0
    %v352 = vpop.f32.mrb[0].mxu0
    %v353 = vadd.f32 %v280, %v352
    %v354 = vpop.f32.mrb[0].mxu0
    %355 = vmatprep.mubr.bf16.mxu0 0
    %356 = vmatmul.mubr.bf16.gmra.mrb[0].mxu0 %v52
    %v357 = vpop.f32.mrb[0].mxu0
    %v358 = vadd.f32 %v281, %v357
    %v359 = vpop.f32.mrb[0].mxu0
    %v360 = vpop.f32.mrb[0].mxu0
    %v361 = vadd.f32 %v282, %v360
    %v362 = vpop.f32.mrb[0].mxu0
    %363 = vmatprep.mubr.bf16.mxu0 0
    %364 = vmatmul.mubr.bf16.gmra.mrb[0].mxu0 %v53
    %v365 = vpop.f32.mrb[0].mxu0
    %v366 = vadd.f32 %v283, %v365
    %v367 = vpop.f32.mrb[0].mxu0
    %v368 = vpop.f32.mrb[0].mxu0
    %v369 = vadd.f32 %v284, %v368
    %v370 = vpop.f32.mrb[0].mxu0
    %371 = vmatprep.mubr.bf16.mxu0 0
    %372 = vmatmul.mubr.bf16.gmra.mrb[0].mxu0 %v54
    %v373 = vpop.f32.mrb[0].mxu0
    %v374 = vadd.f32 %v285, %v373
    %v375 = vpop.f32.mrb[0].mxu0
    %v376 = vpop.f32.mrb[0].mxu0
    %v377 = vadd.f32 %v286, %v376
    %v378 = vpop.f32.mrb[0].mxu0
    %379 = vmatprep.mubr.bf16.mxu0 0
    %380 = vmatmul.mubr.bf16.gmra.mrb[0].mxu0 %v55
    %v381 = vpop.f32.mrb[0].mxu0
    %v382 = vadd.f32 %v287, %v381
    %v383 = vpop.f32.mrb[0].mxu0
    %v384 = vpop.f32.mrb[0].mxu0
    %v385 = vadd.f32 %v288, %v384
    %v386 = vpop.f32.mrb[0].mxu0
    %387 = vmatprep.mubr.bf16.mxu0 0
    %388 = vmatmul.mubr.bf16.gmra.mrb[0].mxu0 %v56
    %v389 = vpop.f32.mrb[0].mxu0
    %v390 = vadd.f32 %v289, %v389
    %v391 = vpop.f32.mrb[0].mxu0
    %v392 = vpop.f32.mrb[0].mxu0
    %v393 = vadd.f32 %v290, %v392
    %v394 = vpop.f32.mrb[0].mxu0
    %395 = vdwg.mxu0
    %v396 = vpack.c.bf16 %v337, %v334
    %v397 = vpack.c.bf16 %v345, %v342
    %v398 = vpack.c.bf16 %v353, %v350
    %v399 = vpack.c.bf16 %v361, %v358
    %v400 = vpack.c.bf16 %v369, %v366
    %v401 = vpack.c.bf16 %v377, %v374
    %v402 = vpack.c.bf16 %v385, %v382
    %v403 = vpack.c.bf16 %v393, %v390
    %v404 = vld [vmem:[%s4] sm:$0xf]
    %v405 = vld [vmem:[%s4 + $0x4] sm:$0xf]
    %v406 = vld [vmem:[%s4 + $0x8] sm:$0xf]
    %v407 = vld [vmem:[%s4 + $0xc] sm:$0xf]
    %v408 = vld [vmem:[%s5] sm:$0x1]
    %v410 = vlaneseq
    %v411 = vshrl.u32 %v410, 7
    %v412 = vsub.s32 0, %v411
    %v413 = vrot.slane %v408, %v412
    %v419 = vunpack.c.l.b16 %v404
    %v420 = vunpack.c.l.b16 %v405
    %v421 = vunpack.c.l.b16 %v406
    %v422 = vunpack.c.l.b16 %v407
    %v423 = vpack.c.b16 %v420, %v419
    %v424 = vpack.c.b16 %v422, %v421
    %vm427 = vcmask 261120
    %v429 = vsel %vm427, %v396, 0
    %v432 = vsel %vm427, %v397, 0
    %v435 = vsel %vm427, %v398, 0
    %v438 = vsel %vm427, %v399, 0
    %v441 = vsel %vm427, %v400, 0
    %v444 = vsel %vm427, %v401, 0
    %v447 = vsel %vm427, %v402, 0
    %v450 = vsel %vm427, %v403, 0
    %452 = vmatprep.subr.bf16.mxu0 0
    %453 = vmatpush1.bf16.msra.mxu0 %v423
    %454 = vmatprep.subr.bf16.mxu0 0
    %455 = vmatpush1.bf16.msra.mxu0 %v424
    %456 = vmatprep.subr.bf16.mxu0 0
    %457 = vmatpush1.bf16.msra.mxu0 0
    %458 = vmatprep.subr.bf16.mxu0 0
    %459 = vmatpush1.bf16.msra.mxu0 0
    %460 = vmatprep.subr.bf16.mxu0 0
    %461 = vmatpush1.bf16.msra.mxu0 0
    %462 = vmatprep.subr.bf16.mxu0 0
    %463 = vmatpush1.bf16.msra.mxu0 0
    %464 = vmatprep.subr.bf16.mxu0 0
    %465 = vmatpush1.bf16.msra.mxu0 0
    %466 = vmatprep.subr.bf16.mxu0 0
    %467 = vmatpush1.bf16.msra.mxu0 0
    %468 = vmatprep.subr.bf16.mxu0 0
    %469 = vmatpush1.bf16.msra.mxu0 0
    %470 = vmatprep.subr.bf16.mxu0 0
    %471 = vmatpush1.bf16.msra.mxu0 0
    %472 = vmatprep.subr.bf16.mxu0 0
    %473 = vmatpush1.bf16.msra.mxu0 0
    %474 = vmatprep.subr.bf16.mxu0 0
    %475 = vmatpush1.bf16.msra.mxu0 0
    %476 = vmatprep.subr.bf16.mxu0 0
    %477 = vmatpush1.bf16.msra.mxu0 0
    %478 = vmatprep.subr.bf16.mxu0 0
    %479 = vmatpush1.bf16.msra.mxu0 0
    %480 = vmatprep.subr.bf16.mxu0 0
    %481 = vmatpush1.bf16.msra.mxu0 0
    %482 = vmatprep.subr.bf16.mxu0 0
    %483 = vmatpush1.bf16.msra.mxu0 0
    %484 = vmatprep.mubr.bf16.mxu0 0
    %485 = vmatmul.mubr.bf16.gmra.mrb[0].mxu0 %v429
    %v486 = vpop.f32.mrb[0].mxu0
    %v487 = vadd.f32 %v413, %v486
    %v488 = vpop.f32.mrb[0].mxu0
    %v489 = vpop.f32.mrb[0].mxu0
    %v490 = vadd.f32 %v413, %v489
    %v491 = vpop.f32.mrb[0].mxu0
    %492 = vmatprep.mubr.bf16.mxu0 0
    %493 = vmatmul.mubr.bf16.gmra.mrb[0].mxu0 %v432
    %v494 = vpop.f32.mrb[0].mxu0
    %v495 = vadd.f32 %v413, %v494
    %v496 = vpop.f32.mrb[0].mxu0
    %v497 = vpop.f32.mrb[0].mxu0
    %v498 = vadd.f32 %v413, %v497
    %v499 = vpop.f32.mrb[0].mxu0
    %500 = vmatprep.mubr.bf16.mxu0 0
    %501 = vmatmul.mubr.bf16.gmra.mrb[0].mxu0 %v435
    %v502 = vpop.f32.mrb[0].mxu0
    %v503 = vadd.f32 %v413, %v502
    %v504 = vpop.f32.mrb[0].mxu0
    %v505 = vpop.f32.mrb[0].mxu0
    %v506 = vadd.f32 %v413, %v505
    %v507 = vpop.f32.mrb[0].mxu0
    %508 = vmatprep.mubr.bf16.mxu0 0
    %509 = vmatmul.mubr.bf16.gmra.mrb[0].mxu0 %v438
    %v510 = vpop.f32.mrb[0].mxu0
    %v511 = vadd.f32 %v413, %v510
    %v512 = vpop.f32.mrb[0].mxu0
    %v513 = vpop.f32.mrb[0].mxu0
    %v514 = vadd.f32 %v413, %v513
    %v515 = vpop.f32.mrb[0].mxu0
    %516 = vmatprep.mubr.bf16.mxu0 0
    %517 = vmatmul.mubr.bf16.gmra.mrb[0].mxu0 %v441
    %v518 = vpop.f32.mrb[0].mxu0
    %v519 = vadd.f32 %v413, %v518
    %v520 = vpop.f32.mrb[0].mxu0
    %v521 = vpop.f32.mrb[0].mxu0
    %v522 = vadd.f32 %v413, %v521
    %v523 = vpop.f32.mrb[0].mxu0
    %524 = vmatprep.mubr.bf16.mxu0 0
    %525 = vmatmul.mubr.bf16.gmra.mrb[0].mxu0 %v444
    %v526 = vpop.f32.mrb[0].mxu0
    %v527 = vadd.f32 %v413, %v526
    %v528 = vpop.f32.mrb[0].mxu0
    %v529 = vpop.f32.mrb[0].mxu0
    %v530 = vadd.f32 %v413, %v529
    %v531 = vpop.f32.mrb[0].mxu0
    %532 = vmatprep.mubr.bf16.mxu0 0
    %533 = vmatmul.mubr.bf16.gmra.mrb[0].mxu0 %v447
    %v534 = vpop.f32.mrb[0].mxu0
    %v535 = vadd.f32 %v413, %v534
    %v536 = vpop.f32.mrb[0].mxu0
    %v537 = vpop.f32.mrb[0].mxu0
    %v538 = vadd.f32 %v413, %v537
    %v539 = vpop.f32.mrb[0].mxu0
    %540 = vmatprep.mubr.bf16.mxu0 0
    %541 = vmatmul.mubr.bf16.gmra.mrb[0].mxu0 %v450
    %v542 = vpop.f32.mrb[0].mxu0
    %v543 = vadd.f32 %v413, %v542
    %v544 = vpop.f32.mrb[0].mxu0
    %v545 = vpop.f32.mrb[0].mxu0
    %v546 = vadd.f32 %v413, %v545
    %v547 = vpop.f32.mrb[0].mxu0
    %548 = vdwg.mxu0
    %v549 = vmax.f32 %v487, 0.0
    %v550 = vmax.f32 %v490, 0.0
    %v551 = vmax.f32 %v495, 0.0
    %v552 = vmax.f32 %v498, 0.0
    %v553 = vmax.f32 %v503, 0.0
    %v554 = vmax.f32 %v506, 0.0
    %v555 = vmax.f32 %v511, 0.0
    %v556 = vmax.f32 %v514, 0.0
    %v557 = vmax.f32 %v519, 0.0
    %v558 = vmax.f32 %v522, 0.0
    %v559 = vmax.f32 %v527, 0.0
    %v560 = vmax.f32 %v530, 0.0
    %v561 = vmax.f32 %v535, 0.0
    %v562 = vmax.f32 %v538, 0.0
    %v563 = vmax.f32 %v543, 0.0
    %v564 = vmax.f32 %v546, 0.0
    %v565 = vpack.c.bf16 %v550, %v549
    %v566 = vpack.c.bf16 %v552, %v551
    %v567 = vpack.c.bf16 %v554, %v553
    %v568 = vpack.c.bf16 %v556, %v555
    %v569 = vpack.c.bf16 %v558, %v557
    %v570 = vpack.c.bf16 %v560, %v559
    %v571 = vpack.c.bf16 %v562, %v561
    %v572 = vpack.c.bf16 %v564, %v563
    %573 = vmatprep.subr.bf16.mxu0 0
    %574 = vmatpush1.bf16.msra.mxu0 %v565
    %575 = vmatprep.subr.bf16.mxu0 0
    %576 = vmatpush1.bf16.msra.mxu0 %v566
    %577 = vmatprep.subr.bf16.mxu0 0
    %578 = vmatpush1.bf16.msra.mxu0 %v567
    %579 = vmatprep.subr.bf16.mxu0 0
    %580 = vmatpush1.bf16.msra.mxu0 %v568
    %581 = vmatprep.subr.bf16.mxu0 0
    %582 = vmatpush1.bf16.msra.mxu0 %v569
    %583 = vmatprep.subr.bf16.mxu0 0
    %584 = vmatpush1.bf16.msra.mxu0 %v570
    %585 = vmatprep.subr.bf16.mxu0 0
    %586 = vmatpush1.bf16.msra.mxu0 %v571
    %587 = vmatprep.subr.bf16.mxu0 0
    %588 = vmatpush1.bf16.msra.mxu0 %v572
    %589 = vmatprep.subr.bf16.mxu0 0
    %590 = vmatpush1.bf16.msra.mxu0 0
    %591 = vmatprep.subr.bf16.mxu0 0
    %592 = vmatpush1.bf16.msra.mxu0 0
    %593 = vmatprep.subr.bf16.mxu0 0
    %594 = vmatpush1.bf16.msra.mxu0 0
    %595 = vmatprep.subr.bf16.mxu0 0
    %596 = vmatpush1.bf16.msra.mxu0 0
    %597 = vmatprep.subr.bf16.mxu0 0
    %598 = vmatpush1.bf16.msra.mxu0 0
    %599 = vmatprep.subr.bf16.mxu0 0
    %600 = vmatpush1.bf16.msra.mxu0 0
    %601 = vmatprep.subr.bf16.mxu0 0
    %602 = vmatpush1.bf16.msra.mxu0 0
    %603 = vmatprep.subr.bf16.mxu0 0
    %604 = vmatpush1.bf16.msra.mxu0 0
    %605 = vmatprep.mubr.bf16.mxu0 0
    %606 = vmatmul.mubr.bf16.gmra.mrb[0].mxu0 %v49
    %v607 = vpop.f32.mrb[0].mxu0
    %v608 = vadd.f32 %v549, %v607
    %v609 = vpop.f32.mrb[0].mxu0
    %v610 = vpop.f32.mrb[0].mxu0
    %v611 = vadd.f32 %v550, %v610
    %v612 = vpop.f32.mrb[0].mxu0
    %613 = vmatprep.mubr.bf16.mxu0 0
    %614 = vmatmul.mubr.bf16.gmra.mrb[0].mxu0 %v50
    %v615 = vpop.f32.mrb[0].mxu0
    %v616 = vadd.f32 %v551, %v615
    %v617 = vpop.f32.mrb[0].mxu0
    %v618 = vpop.f32.mrb[0].mxu0
    %v619 = vadd.f32 %v552, %v618
    %v620 = vpop.f32.mrb[0].mxu0
    %621 = vmatprep.mubr.bf16.mxu0 0
    %622 = vmatmul.mubr.bf16.gmra.mrb[0].mxu0 %v51
    %v623 = vpop.f32.mrb[0].mxu0
    %v624 = vadd.f32 %v553, %v623
    %v625 = vpop.f32.mrb[0].mxu0
    %v626 = vpop.f32.mrb[0].mxu0
    %v627 = vadd.f32 %v554, %v626
    %v628 = vpop.f32.mrb[0].mxu0
    %629 = vmatprep.mubr.bf16.mxu0 0
    %630 = vmatmul.mubr.bf16.gmra.mrb[0].mxu0 %v52
    %v631 = vpop.f32.mrb[0].mxu0
    %v632 = vadd.f32 %v555, %v631
    %v633 = vpop.f32.mrb[0].mxu0
    %v634 = vpop.f32.mrb[0].mxu0
    %v635 = vadd.f32 %v556, %v634
    %v636 = vpop.f32.mrb[0].mxu0
    %637 = vmatprep.mubr.bf16.mxu0 0
    %638 = vmatmul.mubr.bf16.gmra.mrb[0].mxu0 %v53
    %v639 = vpop.f32.mrb[0].mxu0
    %v640 = vadd.f32 %v557, %v639
    %v641 = vpop.f32.mrb[0].mxu0
    %v642 = vpop.f32.mrb[0].mxu0
    %v643 = vadd.f32 %v558, %v642
    %v644 = vpop.f32.mrb[0].mxu0
    %645 = vmatprep.mubr.bf16.mxu0 0
    %646 = vmatmul.mubr.bf16.gmra.mrb[0].mxu0 %v54
    %v647 = vpop.f32.mrb[0].mxu0
    %v648 = vadd.f32 %v559, %v647
    %v649 = vpop.f32.mrb[0].mxu0
    %v650 = vpop.f32.mrb[0].mxu0
    %v651 = vadd.f32 %v560, %v650
    %v652 = vpop.f32.mrb[0].mxu0
    %653 = vmatprep.mubr.bf16.mxu0 0
    %654 = vmatmul.mubr.bf16.gmra.mrb[0].mxu0 %v55
    %v655 = vpop.f32.mrb[0].mxu0
    %v656 = vadd.f32 %v561, %v655
    %v657 = vpop.f32.mrb[0].mxu0
    %v658 = vpop.f32.mrb[0].mxu0
    %v659 = vadd.f32 %v562, %v658
    %v660 = vpop.f32.mrb[0].mxu0
    %661 = vmatprep.mubr.bf16.mxu0 0
    %662 = vmatmul.mubr.bf16.gmra.mrb[0].mxu0 %v56
    %v663 = vpop.f32.mrb[0].mxu0
    %v664 = vadd.f32 %v563, %v663
    %v665 = vpop.f32.mrb[0].mxu0
    %v666 = vpop.f32.mrb[0].mxu0
    %v667 = vadd.f32 %v564, %v666
    %v668 = vpop.f32.mrb[0].mxu0
    %669 = vdwg.mxu0
    %v670 = vpack.c.bf16 %v611, %v608
    %v671 = vpack.c.bf16 %v619, %v616
    %v672 = vpack.c.bf16 %v627, %v624
    %v673 = vpack.c.bf16 %v635, %v632
    %v674 = vpack.c.bf16 %v643, %v640
    %v675 = vpack.c.bf16 %v651, %v648
    %v676 = vpack.c.bf16 %v659, %v656
    %v677 = vpack.c.bf16 %v667, %v664
    %v678 = vld [vmem:[%s6] sm:$0xf]
    %v679 = vld [vmem:[%s6 + $0x4] sm:$0xf]
    %v680 = vld [vmem:[%s6 + $0x8] sm:$0xf]
    %v681 = vld [vmem:[%s6 + $0xc] sm:$0xf]
    %v682 = vld [vmem:[%s7] sm:$0x1]
    %v684 = vlaneseq
    %v685 = vshrl.u32 %v684, 7
    %v686 = vsub.s32 0, %v685
    %v687 = vrot.slane %v682, %v686
    %v693 = vunpack.c.l.b16 %v678
    %v694 = vunpack.c.l.b16 %v679
    %v695 = vunpack.c.l.b16 %v680
    %v696 = vunpack.c.l.b16 %v681
    %v697 = vpack.c.b16 %v694, %v693
    %v698 = vpack.c.b16 %v696, %v695
    %v702 = vsel %vm427, %v670, 0
    %v705 = vsel %vm427, %v671, 0
    %v708 = vsel %vm427, %v672, 0
    %v711 = vsel %vm427, %v673, 0
    %v714 = vsel %vm427, %v674, 0
    %v717 = vsel %vm427, %v675, 0
    %v720 = vsel %vm427, %v676, 0
    %v723 = vsel %vm427, %v677, 0
    %725 = vmatprep.subr.bf16.mxu0 0
    %726 = vmatpush1.bf16.msra.mxu0 %v697
    %727 = vmatprep.subr.bf16.mxu0 0
    %728 = vmatpush1.bf16.msra.mxu0 %v698
    %729 = vmatprep.subr.bf16.mxu0 0
    %730 = vmatpush1.bf16.msra.mxu0 0
    %731 = vmatprep.subr.bf16.mxu0 0
    %732 = vmatpush1.bf16.msra.mxu0 0
    %733 = vmatprep.subr.bf16.mxu0 0
    %734 = vmatpush1.bf16.msra.mxu0 0
    %735 = vmatprep.subr.bf16.mxu0 0
    %736 = vmatpush1.bf16.msra.mxu0 0
    %737 = vmatprep.subr.bf16.mxu0 0
    %738 = vmatpush1.bf16.msra.mxu0 0
    %739 = vmatprep.subr.bf16.mxu0 0
    %740 = vmatpush1.bf16.msra.mxu0 0
    %741 = vmatprep.subr.bf16.mxu0 0
    %742 = vmatpush1.bf16.msra.mxu0 0
    %743 = vmatprep.subr.bf16.mxu0 0
    %744 = vmatpush1.bf16.msra.mxu0 0
    %745 = vmatprep.subr.bf16.mxu0 0
    %746 = vmatpush1.bf16.msra.mxu0 0
    %747 = vmatprep.subr.bf16.mxu0 0
    %748 = vmatpush1.bf16.msra.mxu0 0
    %749 = vmatprep.subr.bf16.mxu0 0
    %750 = vmatpush1.bf16.msra.mxu0 0
    %751 = vmatprep.subr.bf16.mxu0 0
    %752 = vmatpush1.bf16.msra.mxu0 0
    %753 = vmatprep.subr.bf16.mxu0 0
    %754 = vmatpush1.bf16.msra.mxu0 0
    %755 = vmatprep.subr.bf16.mxu0 0
    %756 = vmatpush1.bf16.msra.mxu0 0
    %757 = vmatprep.mubr.bf16.mxu0 0
    %758 = vmatmul.mubr.bf16.gmra.mrb[0].mxu0 %v702
    %v759 = vpop.f32.mrb[0].mxu0
    %v760 = vadd.f32 %v687, %v759
    %v761 = vpop.f32.mrb[0].mxu0
    %v762 = vpop.f32.mrb[0].mxu0
    %v763 = vadd.f32 %v687, %v762
    %v764 = vpop.f32.mrb[0].mxu0
    %765 = vmatprep.mubr.bf16.mxu0 0
    %766 = vmatmul.mubr.bf16.gmra.mrb[0].mxu0 %v705
    %v767 = vpop.f32.mrb[0].mxu0
    %v768 = vadd.f32 %v687, %v767
    %v769 = vpop.f32.mrb[0].mxu0
    %v770 = vpop.f32.mrb[0].mxu0
    %v771 = vadd.f32 %v687, %v770
    %v772 = vpop.f32.mrb[0].mxu0
    %773 = vmatprep.mubr.bf16.mxu0 0
    %774 = vmatmul.mubr.bf16.gmra.mrb[0].mxu0 %v708
    %v775 = vpop.f32.mrb[0].mxu0
    %v776 = vadd.f32 %v687, %v775
    %v777 = vpop.f32.mrb[0].mxu0
    %v778 = vpop.f32.mrb[0].mxu0
    %v779 = vadd.f32 %v687, %v778
    %v780 = vpop.f32.mrb[0].mxu0
    %781 = vmatprep.mubr.bf16.mxu0 0
    %782 = vmatmul.mubr.bf16.gmra.mrb[0].mxu0 %v711
    %v783 = vpop.f32.mrb[0].mxu0
    %v784 = vadd.f32 %v687, %v783
    %v785 = vpop.f32.mrb[0].mxu0
    %v786 = vpop.f32.mrb[0].mxu0
    %v787 = vadd.f32 %v687, %v786
    %v788 = vpop.f32.mrb[0].mxu0
    %789 = vmatprep.mubr.bf16.mxu0 0
    %790 = vmatmul.mubr.bf16.gmra.mrb[0].mxu0 %v714
    %v791 = vpop.f32.mrb[0].mxu0
    %v792 = vadd.f32 %v687, %v791
    %v793 = vpop.f32.mrb[0].mxu0
    %v794 = vpop.f32.mrb[0].mxu0
    %v795 = vadd.f32 %v687, %v794
    %v796 = vpop.f32.mrb[0].mxu0
    %797 = vmatprep.mubr.bf16.mxu0 0
    %798 = vmatmul.mubr.bf16.gmra.mrb[0].mxu0 %v717
    %v799 = vpop.f32.mrb[0].mxu0
    %v800 = vadd.f32 %v687, %v799
    %v801 = vpop.f32.mrb[0].mxu0
    %v802 = vpop.f32.mrb[0].mxu0
    %v803 = vadd.f32 %v687, %v802
    %v804 = vpop.f32.mrb[0].mxu0
    %805 = vmatprep.mubr.bf16.mxu0 0
    %806 = vmatmul.mubr.bf16.gmra.mrb[0].mxu0 %v720
    %v807 = vpop.f32.mrb[0].mxu0
    %v808 = vadd.f32 %v687, %v807
    %v809 = vpop.f32.mrb[0].mxu0
    %v810 = vpop.f32.mrb[0].mxu0
    %v811 = vadd.f32 %v687, %v810
    %v812 = vpop.f32.mrb[0].mxu0
    %813 = vmatprep.mubr.bf16.mxu0 0
    %814 = vmatmul.mubr.bf16.gmra.mrb[0].mxu0 %v723
    %v815 = vpop.f32.mrb[0].mxu0
    %v816 = vadd.f32 %v687, %v815
    %v817 = vpop.f32.mrb[0].mxu0
    %v818 = vpop.f32.mrb[0].mxu0
    %v819 = vadd.f32 %v687, %v818
    %v820 = vpop.f32.mrb[0].mxu0
    %821 = vdwg.mxu0
    %v822 = vmax.f32 %v760, 0.0
    %v823 = vmax.f32 %v763, 0.0
    %v824 = vmax.f32 %v768, 0.0
    %v825 = vmax.f32 %v771, 0.0
    %v826 = vmax.f32 %v776, 0.0
    %v827 = vmax.f32 %v779, 0.0
    %v828 = vmax.f32 %v784, 0.0
    %v829 = vmax.f32 %v787, 0.0
    %v830 = vmax.f32 %v792, 0.0
    %v831 = vmax.f32 %v795, 0.0
    %v832 = vmax.f32 %v800, 0.0
    %v833 = vmax.f32 %v803, 0.0
    %v834 = vmax.f32 %v808, 0.0
    %v835 = vmax.f32 %v811, 0.0
    %v836 = vmax.f32 %v816, 0.0
    %v837 = vmax.f32 %v819, 0.0
    %v838 = vpack.c.bf16 %v823, %v822
    %v839 = vpack.c.bf16 %v825, %v824
    %v840 = vpack.c.bf16 %v827, %v826
    %v841 = vpack.c.bf16 %v829, %v828
    %v842 = vpack.c.bf16 %v831, %v830
    %v843 = vpack.c.bf16 %v833, %v832
    %v844 = vpack.c.bf16 %v835, %v834
    %v845 = vpack.c.bf16 %v837, %v836
    %v846 = vld [vmem:[%s8] sm:$0xf]
    %v847 = vld [vmem:[%s8 + $0x4] sm:$0xf]
    %v848 = vld [vmem:[%s8 + $0x8] sm:$0xf]
    %v849 = vld [vmem:[%s8 + $0xc] sm:$0xf]
    %v850 = vld [vmem:[%s9] sm:$0x1]
    %v852 = vlaneseq
    %v853 = vshrl.u32 %v852, 7
    %v854 = vsub.s32 0, %v853
    %v855 = vrot.slane %v850, %v854
    %v861 = vunpack.c.l.b16 %v846
    %v862 = vunpack.c.l.b16 %v847
    %v863 = vunpack.c.l.b16 %v848
    %v864 = vunpack.c.l.b16 %v849
    %v865 = vpack.c.b16 %v862, %v861
    %v866 = vpack.c.b16 %v864, %v863
    %v870 = vsel %vm427, %v838, 0
    %v873 = vsel %vm427, %v839, 0
    %v876 = vsel %vm427, %v840, 0
    %v879 = vsel %vm427, %v841, 0
    %v882 = vsel %vm427, %v842, 0
    %v885 = vsel %vm427, %v843, 0
    %v888 = vsel %vm427, %v844, 0
    %v891 = vsel %vm427, %v845, 0
    %893 = vmatprep.subr.bf16.mxu0 0
    %894 = vmatpush1.bf16.msra.mxu0 %v865
    %895 = vmatprep.subr.bf16.mxu0 0
    %896 = vmatpush1.bf16.msra.mxu0 %v866
    %897 = vmatprep.subr.bf16.mxu0 0
    %898 = vmatpush1.bf16.msra.mxu0 0
    %899 = vmatprep.subr.bf16.mxu0 0
    %900 = vmatpush1.bf16.msra.mxu0 0
    %901 = vmatprep.subr.bf16.mxu0 0
    %902 = vmatpush1.bf16.msra.mxu0 0
    %903 = vmatprep.subr.bf16.mxu0 0
    %904 = vmatpush1.bf16.msra.mxu0 0
    %905 = vmatprep.subr.bf16.mxu0 0
    %906 = vmatpush1.bf16.msra.mxu0 0
    %907 = vmatprep.subr.bf16.mxu0 0
    %908 = vmatpush1.bf16.msra.mxu0 0
    %909 = vmatprep.subr.bf16.mxu0 0
    %910 = vmatpush1.bf16.msra.mxu0 0
    %911 = vmatprep.subr.bf16.mxu0 0
    %912 = vmatpush1.bf16.msra.mxu0 0
    %913 = vmatprep.subr.bf16.mxu0 0
    %914 = vmatpush1.bf16.msra.mxu0 0
    %915 = vmatprep.subr.bf16.mxu0 0
    %916 = vmatpush1.bf16.msra.mxu0 0
    %917 = vmatprep.subr.bf16.mxu0 0
    %918 = vmatpush1.bf16.msra.mxu0 0
    %919 = vmatprep.subr.bf16.mxu0 0
    %920 = vmatpush1.bf16.msra.mxu0 0
    %921 = vmatprep.subr.bf16.mxu0 0
    %922 = vmatpush1.bf16.msra.mxu0 0
    %923 = vmatprep.subr.bf16.mxu0 0
    %924 = vmatpush1.bf16.msra.mxu0 0
    %925 = vmatprep.mubr.bf16.mxu0 0
    %926 = vmatmul.mubr.bf16.gmra.mrb[0].mxu0 %v870
    %v927 = vpop.f32.mrb[0].mxu0
    %v928 = vadd.f32 %v855, %v927
    %v929 = vpop.f32.mrb[0].mxu0
    %v930 = vpop.f32.mrb[0].mxu0
    %v931 = vadd.f32 %v855, %v930
    %v932 = vpop.f32.mrb[0].mxu0
    %933 = vmatprep.mubr.bf16.mxu0 0
    %934 = vmatmul.mubr.bf16.gmra.mrb[0].mxu0 %v873
    %v935 = vpop.f32.mrb[0].mxu0
    %v936 = vadd.f32 %v855, %v935
    %v937 = vpop.f32.mrb[0].mxu0
    %v938 = vpop.f32.mrb[0].mxu0
    %v939 = vadd.f32 %v855, %v938
    %v940 = vpop.f32.mrb[0].mxu0
    %941 = vmatprep.mubr.bf16.mxu0 0
    %942 = vmatmul.mubr.bf16.gmra.mrb[0].mxu0 %v876
    %v943 = vpop.f32.mrb[0].mxu0
    %v944 = vadd.f32 %v855, %v943
    %v945 = vpop.f32.mrb[0].mxu0
    %v946 = vpop.f32.mrb[0].mxu0
    %v947 = vadd.f32 %v855, %v946
    %v948 = vpop.f32.mrb[0].mxu0
    %949 = vmatprep.mubr.bf16.mxu0 0
    %950 = vmatmul.mubr.bf16.gmra.mrb[0].mxu0 %v879
    %v951 = vpop.f32.mrb[0].mxu0
    %v952 = vadd.f32 %v855, %v951
    %v953 = vpop.f32.mrb[0].mxu0
    %v954 = vpop.f32.mrb[0].mxu0
    %v955 = vadd.f32 %v855, %v954
    %v956 = vpop.f32.mrb[0].mxu0
    %957 = vmatprep.mubr.bf16.mxu0 0
    %958 = vmatmul.mubr.bf16.gmra.mrb[0].mxu0 %v882
    %v959 = vpop.f32.mrb[0].mxu0
    %v960 = vadd.f32 %v855, %v959
    %v961 = vpop.f32.mrb[0].mxu0
    %v962 = vpop.f32.mrb[0].mxu0
    %v963 = vadd.f32 %v855, %v962
    %v964 = vpop.f32.mrb[0].mxu0
    %965 = vmatprep.mubr.bf16.mxu0 0
    %966 = vmatmul.mubr.bf16.gmra.mrb[0].mxu0 %v885
    %v967 = vpop.f32.mrb[0].mxu0
    %v968 = vadd.f32 %v855, %v967
    %v969 = vpop.f32.mrb[0].mxu0
    %v970 = vpop.f32.mrb[0].mxu0
    %v971 = vadd.f32 %v855, %v970
    %v972 = vpop.f32.mrb[0].mxu0
    %973 = vmatprep.mubr.bf16.mxu0 0
    %974 = vmatmul.mubr.bf16.gmra.mrb[0].mxu0 %v888
    %v975 = vpop.f32.mrb[0].mxu0
    %v976 = vadd.f32 %v855, %v975
    %v977 = vpop.f32.mrb[0].mxu0
    %v978 = vpop.f32.mrb[0].mxu0
    %v979 = vadd.f32 %v855, %v978
    %v980 = vpop.f32.mrb[0].mxu0
    %981 = vmatprep.mubr.bf16.mxu0 0
    %982 = vmatmul.mubr.bf16.gmra.mrb[0].mxu0 %v891
    %v983 = vpop.f32.mrb[0].mxu0
    %v984 = vadd.f32 %v855, %v983
    %v985 = vpop.f32.mrb[0].mxu0
    %v986 = vpop.f32.mrb[0].mxu0
    %v987 = vadd.f32 %v855, %v986
    %v988 = vpop.f32.mrb[0].mxu0
    %989 = vdwg.mxu0
    %v990 = vmax.f32 %v928, 0.0
    %v991 = vmax.f32 %v931, 0.0
    %v992 = vmax.f32 %v936, 0.0
    %v993 = vmax.f32 %v939, 0.0
    %v994 = vmax.f32 %v944, 0.0
    %v995 = vmax.f32 %v947, 0.0
    %v996 = vmax.f32 %v952, 0.0
    %v997 = vmax.f32 %v955, 0.0
    %v998 = vmax.f32 %v960, 0.0
    %v999 = vmax.f32 %v963, 0.0
    %v1000 = vmax.f32 %v968, 0.0
    %v1001 = vmax.f32 %v971, 0.0
    %v1002 = vmax.f32 %v976, 0.0
    %v1003 = vmax.f32 %v979, 0.0
    %v1004 = vmax.f32 %v984, 0.0
    %v1005 = vmax.f32 %v987, 0.0
    %v1006 = vld [vmem:[%s10] sm:$0xff]
    %vm1007 = vcmask 130048
    %v1009 = vsel %vm1007, %v1006, 0
    %v1012 = vsel %vm1007, %v990, 0
    %v1015 = vsel %vm1007, %v991, 0
    %v1018 = vsel %vm1007, %v992, 0
    %v1021 = vsel %vm1007, %v993, 0
    %v1024 = vsel %vm1007, %v994, 0
    %v1027 = vsel %vm1007, %v995, 0
    %v1030 = vsel %vm1007, %v996, 0
    %v1033 = vsel %vm1007, %v997, 0
    %v1036 = vsel %vm1007, %v998, 0
    %v1039 = vsel %vm1007, %v999, 0
    %v1042 = vsel %vm1007, %v1000, 0
    %v1045 = vsel %vm1007, %v1001, 0
    %v1048 = vsel %vm1007, %v1002, 0
    %v1051 = vsel %vm1007, %v1003, 0
    %v1054 = vsel %vm1007, %v1004, 0
    %v1057 = vsel %vm1007, %v1005, 0
    %1059 = vmatprep.subr.mxu0 0.0
    %1060 = vmatpush1.xpose.msra.mxu0 %v1012
    %1061 = vmatprep.subr.mxu0 0.0
    %1062 = vmatpush1.xpose.msra.mxu0 %v1015
    %1063 = vmatprep.subr.mxu0 0.0
    %1064 = vmatpush1.xpose.msra.mxu0 %v1018
    %1065 = vmatprep.subr.mxu0 0.0
    %1066 = vmatpush1.xpose.msra.mxu0 %v1021
    %1067 = vmatprep.subr.mxu0 0.0
    %1068 = vmatpush1.xpose.msra.mxu0 %v1024
    %1069 = vmatprep.subr.mxu0 0.0
    %1070 = vmatpush1.xpose.msra.mxu0 %v1027
    %1071 = vmatprep.subr.mxu0 0.0
    %1072 = vmatpush1.xpose.msra.mxu0 %v1030
    %1073 = vmatprep.subr.mxu0 0.0
    %1074 = vmatpush1.xpose.msra.mxu0 %v1033
    %1075 = vmatprep.subr.mxu0 0.0
    %1076 = vmatpush1.xpose.msra.mxu0 %v1036
    %1077 = vmatprep.subr.mxu0 0.0
    %1078 = vmatpush1.xpose.msra.mxu0 %v1039
    %1079 = vmatprep.subr.mxu0 0.0
    %1080 = vmatpush1.xpose.msra.mxu0 %v1042
    %1081 = vmatprep.subr.mxu0 0.0
    %1082 = vmatpush1.xpose.msra.mxu0 %v1045
    %1083 = vmatprep.subr.mxu0 0.0
    %1084 = vmatpush1.xpose.msra.mxu0 %v1048
    %1085 = vmatprep.subr.mxu0 0.0
    %1086 = vmatpush1.xpose.msra.mxu0 %v1051
    %1087 = vmatprep.subr.mxu0 0.0
    %1088 = vmatpush1.xpose.msra.mxu0 %v1054
    %1089 = vmatprep.subr.mxu0 0.0
    %1090 = vmatpush1.xpose.msra.mxu0 %v1057
    %1091 = vmatprep.subr.mxu0 0.0
    %1092 = vmatpush1.xpose.msra.mxu0 0.0
    %1093 = vmatprep.subr.mxu0 0.0
    %1094 = vmatpush1.xpose.msra.mxu0 0.0
    %1095 = vmatprep.subr.mxu0 0.0
    %1096 = vmatpush1.xpose.msra.mxu0 0.0
    %1097 = vmatprep.subr.mxu0 0.0
    %1098 = vmatpush1.xpose.msra.mxu0 0.0
    %1099 = vmatprep.subr.mxu0 0.0
    %1100 = vmatpush1.xpose.msra.mxu0 0.0
    %1101 = vmatprep.subr.mxu0 0.0
    %1102 = vmatpush1.xpose.msra.mxu0 0.0
    %1103 = vmatprep.subr.mxu0 0.0
    %1104 = vmatpush1.xpose.msra.mxu0 0.0
    %1105 = vmatprep.subr.mxu0 0.0
    %1106 = vmatpush1.xpose.msra.mxu0 0.0
    %1107 = vmatprep.subr.mxu0 0.0
    %1108 = vmatpush1.xpose.msra.mxu0 0.0
    %1109 = vmatprep.subr.mxu0 0.0
    %1110 = vmatpush1.xpose.msra.mxu0 0.0
    %1111 = vmatprep.subr.mxu0 0.0
    %1112 = vmatpush1.xpose.msra.mxu0 0.0
    %1113 = vmatprep.subr.mxu0 0.0
    %1114 = vmatpush1.xpose.msra.mxu0 0.0
    %1115 = vmatprep.subr.mxu0 0.0
    %1116 = vmatpush1.xpose.msra.mxu0 0.0
    %1117 = vmatprep.subr.mxu0 0.0
    %1118 = vmatpush1.xpose.msra.mxu0 0.0
    %1119 = vmatprep.subr.mxu0 0.0
    %1120 = vmatpush1.xpose.msra.mxu0 0.0
    %1121 = vmatprep.subr.mxu0 0.0
    %1122 = vmatpush1.xpose.msra.mxu0 0.0
    %1123 = vmatprep.mubr.f32.mxu0 0.0
    %1124 = vmatmul.mubr.f32.gmra.mrb[0].mxu0 %v1009
    %v1125 = vpop.f32.mrb[0].mxu0
    %v1126 = vadd.f32 0.0, %v1125
    %v1127 = vpop.f32.mrb[0].mxu0
    %1128 = vdwg.mxu0
    %v1129 = vld [vmem:[#allocation2] sm:$0x1]
    %1131 = vset.pattern.permute.xlu0 0
    %1132 = vperm.xlu0 %1131, %v1129
    %v1133 = vpop.permute.xlu0 %1132
    %v1135 = vlaneseq
    %v1136 = vshrl.u32 %v1135, 7
    %v1137 = vsub.s32 0, %v1136
    %v1138 = vrot.slane %v1133, %v1137
    %v1139 = vadd.f32 %v1126, %v1138
    %v1140 = vxor.u32 %v1139, 2147483648
    %v1141 = vmul.f32 %v1140, 1.442695
    %v1142 = vpow.pop %v1141
    %v1143 = vadd.f32 %v1142, 1.0
    %v1144 = vrcp.pop %v1143
    %v1145 = vmul.f32 1.0, %v1144
    %1146 = vst [vmem:[#allocation3] sm:$0x1] %v1145
    // Predicated region
    $region50: #{tpu_custom_call.1} parent=1 // pred_check
      _
    $region51: #{tpu_custom_call.1} parent=1 // pred_check_branch
      %1148 = sbr.rel (0) target = $region53
    $region52: #{tpu_custom_call.1} parent=1 // pred_region
      %s1150 = ssub.s32 16, 16
      %1151 = vsyncadd [#allocation4], %s1150
      %s1153 = sshll.u32 [#allocation3], 4
      %s1154 = int_to_ptr.vmem [resolvable:$true] %s1153
      %1156 = dma.vmem_to_hbm [thread:$0]  %s1154, 16, %s12, [#allocation4]
    $region53: #{tpu_custom_call.1} parent=1 // pred_fallthru
      _
    // Predicated region
    $region54: #{tpu_custom_call.1} parent=1 // pred_check
      _
    $region55: #{tpu_custom_call.1} parent=1 // pred_check_branch
      %1158 = sbr.rel (0) target = $region57
    $region56: #{tpu_custom_call.1} parent=1 // pred_region
      %1159 = dma.done [#allocation4], 16
    $region57: #{tpu_custom_call.1} parent=1 // pred_fallthru
      _
    %1160 = vsyncpa [#allocation4], 1

</llo_original>
